<compile_context>
chip_gen: v6e
topology: v6e:2x2x1
jax: 0.10.0
libtpu: 0.0.40
codegen_flags: <defaults>
</compile_context>

<pallas_src>
import numpy as np
import jax
import jax.numpy as jnp
from jax.experimental import pallas as pl
from jax.experimental.pallas import tpu as pltpu

_EPS = 1e-5


def _round_up(n, m):
    return ((n + m - 1) // m) * m


# ------------------------------ Pallas kernel --------------------------------

_W_ORDER = ("W2", "b2", "W1", "b1", "WAB", "bAB", "WBS", "bBS",
            "WC", "bC", "WD", "bD")


def _decoder_kernel(z_ref, skip_ref,
                    w2_ref, b2_ref, w1_ref, b1_ref,
                    wab_ref, bab_ref, wbs_ref, bbs_ref,
                    wc_ref, bc_ref, wd_ref, bd_ref,
                    out_ref):
    """Entire DecoderSkip forward for one batch tile: 6 chained MXU matmuls."""

    def dense(x, w_ref, b_ref, act):
        # bf16 MXU operands, f32 accumulation, f32 epilogue.
        y = jnp.dot(x.astype(jnp.bfloat16), w_ref[...],
                    preferred_element_type=jnp.float32)
        y = y + b_ref[...]
        if act == "relu":
            y = jnp.maximum(y, 0.0)
        elif act == "tanh":
            y = jnp.tanh(y)
        return y

    x = dense(z_ref[...], w2_ref, b2_ref, "relu")      # linear2 (+bn4) + relu
    x = dense(x, w1_ref, b1_ref, "relu")               # linear1 (+bn3) + relu (padded to 128 lanes)
    # Main path and skip path fused: concat boundary is vreg-aligned (lane 128).
    h = jnp.concatenate([x, skip_ref[...]], axis=1)    # (TB, 128 + 192), f32
    h = dense(h, wab_ref, bab_ref, "relu")             # [up1 o deconv2_2 | deconv_skip_2] + relu
    h = dense(h, wbs_ref, bbs_ref, "relu")             # [deconv2_1 (+bn1) | deconv_skip_1] + relu
    # Residual add + skip_norm affine are folded into WC / bC.
    x = dense(h, wc_ref, bc_ref, "relu")               # up2 o deconv1_2 + relu
    out_ref[...] = dense(x, wd_ref, bd_ref, "tanh")    # deconv1_1 + tanh, NCHW cols, 128-lane dense


def decoder_skip_forward(fused, z, skip_nchw, meta):
    """z: (B, latent) f32, skip_nchw: (B, 12, 2*s0, 2*s0) f32 -> (B, C, H, W)."""
    B = z.shape[0]
    C, H, W = meta["out_chw"]
    n_out, n_out_pad = meta["n_out"], meta["n_out_pad"]

    z = z.astype(jnp.float32)
    skip_flat = skip_nchw.reshape(B, -1).astype(jnp.float32)   # keeps (c,h,w) order
    assert skip_flat.shape[1] == meta["n_skip"]

    # Batch tile: as large as the batch allows, capped at 128 rows (sweepable).
    TB = B if B <= 128 else 128
    Bp = ((B + TB - 1) // TB) * TB
    if Bp != B:
        z = jnp.pad(z, ((0, Bp - B), (0, 0)))
        skip_flat = jnp.pad(skip_flat, ((0, Bp - B), (0, 0)))
    grid = (Bp // TB,)

    weights = [fused[k] for k in _W_ORDER]

    def row_spec(ncols):
        return pl.BlockSpec((TB, ncols), lambda i: (i, 0))

    def full_spec(arr):
        shp = arr.shape
        # Constant block index across the batch grid -> fetched once.
        return pl.BlockSpec(shp, lambda i: (0,) * len(shp))

    out_flat = pl.pallas_call(
        _decoder_kernel,
        grid=grid,
        in_specs=[row_spec(z.shape[1]), row_spec(skip_flat.shape[1])]
                 + [full_spec(w) for w in weights],
        out_specs=row_spec(n_out_pad),
        out_shape=jax.ShapeDtypeStruct((Bp, n_out_pad), jnp.float32),
        compiler_params=pltpu.CompilerParams(
            dimension_semantics=("parallel",)),   # batch tiles shard on v7x
    )(z, skip_flat, *weights)

    return out_flat[:B, :n_out].reshape(B, C, H, W)   # free reshape (already (c,h,w))


# ---------------- offline parameter preparation (runs once) ------------------

def _np(x):
    return np.asarray(jax.device_get(x), dtype=np.float32)


def _bn_fold(bn):
    scale = _np(bn["gamma"]) / np.sqrt(_np(bn["rv"]) + _EPS)
    shift = _np(bn["beta"]) - _np(bn["rm"]) * scale
    return scale, shift


def _convT_as_conv_kernel(w_t):
    # PyTorch ConvTranspose2d weight (Cin, Cout, K, K) -> equivalent regular
    # conv kernel (K, K, Cin, Cout): spatial flip + channel transpose.
    return np.ascontiguousarray(
        np.transpose(_np(w_t)[:, :, ::-1, ::-1], (2, 3, 0, 1)))


def _conv_matrix(kc, hin, win, pad):
    # Dense matrix of a stride-1 conv with zero padding `pad` on a
    # (hin, win, Cin) image; rows/cols are (h, w, c)-flattened vectors.
    K, _, cin, cout = kc.shape
    ho = hin + 2 * pad - K + 1
    wo = win + 2 * pad - K + 1
    m = np.zeros((hin * win * cin, ho * wo * cout), np.float32)
    for oy in range(ho):
        for ox in range(wo):
            c0 = (oy * wo + ox) * cout
            for ky in range(K):
                iy = oy + ky - pad
                if not 0 <= iy < hin:
                    continue
                for kx in range(K):
                    ix = ox + kx - pad
                    if not 0 <= ix < win:
                        continue
                    r0 = (iy * win + ix) * cin
                    m[r0:r0 + cin, c0:c0 + cout] += kc[ky, kx]
    return m, ho, wo


def _upsample2_matrix(hin, win, c):
    # Nearest-neighbour 2x upsampling as a dense (h,w,c)-flat matrix.
    ho, wo = 2 * hin, 2 * win
    u = np.zeros((hin * win * c, ho * wo * c), np.float32)
    eye = np.eye(c, dtype=np.float32)
    for oy in range(ho):
        for ox in range(wo):
            r0 = ((oy // 2) * win + (ox // 2)) * c
            c0 = (oy * wo + ox) * c
            u[r0:r0 + c, c0:c0 + c] += eye
    return u


def build_fused_params(raw, channels):
    s0, dc2, dc1 = raw["s0"], raw["dc2"], raw["dc1"]

    # ------- per-layer matrices (BN folded, convT rewritten as conv) ---------
    sc4, sh4 = _bn_fold(raw["bn4"])
    W2 = _np(raw["linear2_w"]).T * sc4[None, :]
    b2 = _np(raw["linear2_b"]) * sc4 + sh4

    sc3, sh3 = _bn_fold(raw["bn3"])
    W1 = _np(raw["linear1_w"]).T * sc3[None, :]
    b1 = _np(raw["linear1_b"]) * sc3 + sh3
    n1 = dc2 * s0 * s0
    perm = np.empty(n1, np.int64)
    for h in range(s0):
        for w in range(s0):
            for c in range(dc2):
                perm[(h * s0 + w) * dc2 + c] = c * s0 * s0 + h * s0 + w
    W1 = W1[:, perm]                                    # (c,h,w) -> (h,w,c) cols
    b1 = b1[perm]

    hu, wu = 2 * s0, 2 * s0
    # main stage A: upsample x2 then deconv2_2 (K=2, torch pad 1 -> conv pad 0)
    U1 = _upsample2_matrix(s0, s0, dc2)
    MA, hA, wA = _conv_matrix(_convT_as_conv_kernel(raw["deconv2_2_w"]), hu, wu, 0)
    A = U1 @ MA
    bA = np.tile(_np(raw["deconv2_2_b"]), hA * wA)

    # main stage B: deconv2_1 (K=3, conv pad 1) + bn1 folded
    sc1, sh1 = _bn_fold(raw["bn1"])
    kB = _convT_as_conv_kernel(raw["deconv2_1_w"]) * sc1[None, None, None, :]
    bB0 = _np(raw["deconv2_1_b"]) * sc1 + sh1
    Bm, hB, wB = _conv_matrix(kB, hA, wA, 1)
    bB = np.tile(bB0, hB * wB)

    # skip stage S2: consumes the NCHW-flat skip directly (row perm folded in)
    MS2, hS2, wS2 = _conv_matrix(_convT_as_conv_kernel(raw["deconv_skip_2_w"]), hu, wu, 0)
    rperm = np.empty(hu * wu * dc2, np.int64)
    for c in range(dc2):
        for h in range(hu):
            for w in range(wu):
                rperm[c * hu * wu + h * wu + w] = (h * wu + w) * dc2 + c
    S2 = MS2[rperm, :]
    bS2 = np.tile(_np(raw["deconv_skip_2_b"]), hS2 * wS2)

    # skip stage S1
    S1, hS1, wS1 = _conv_matrix(_convT_as_conv_kernel(raw["deconv_skip_1_w"]), hS2, wS2, 1)
    bS1 = np.tile(_np(raw["deconv_skip_1_b"]), hS1 * wS1)
    assert (hS1, wS1) == (hB, wB) and (hS2, wS2) == (hA, wA)

    # skip_norm affine (folded into stage C below)
    scn, shn = _bn_fold(raw["skip_norm"])
    sn_scale = np.tile(scn, hB * wB)
    sn_shift = np.tile(shn, hB * wB)

    # stage C: upsample x2 then deconv1_2 (K=2, conv pad 0)
    U2 = _upsample2_matrix(hB, wB, dc1)
    MC, hC, wC = _conv_matrix(_convT_as_conv_kernel(raw["deconv1_2_w"]), 2 * hB, 2 * wB, 0)
    Cm = U2 @ MC
    bC = np.tile(_np(raw["deconv1_2_b"]), hC * wC)

    # stage D: deconv1_1 (K=3, conv pad 1); columns reordered to NCHW (c,h,w)
    Dm, hD, wD = _conv_matrix(_convT_as_conv_kernel(raw["deconv1_1_w"]), hC, wC, 1)
    cperm = np.empty(hD * wD * channels, np.int64)
    for c in range(channels):
        for h in range(hD):
            for w in range(wD):
                cperm[c * hD * wD + h * wD + w] = (h * wD + w) * channels + c
    Dm = Dm[:, cperm]
    bD = np.repeat(_np(raw["deconv1_1_b"]), hD * wD)

    # ------- lane-aligned, block-diagonal fusion ------------------------------
    n_skip = hu * wu * dc2            # 192
    nA = hA * wA * dc2                # 108
    nB = hB * wB * dc1                # 72
    nC = hC * wC * dc1                # 200
    nD = hD * wD * channels           # 50
    P1 = _round_up(n1, 128)           # 128 : padded M1 output width
    PA = _round_up(nA, 128)           # 128
    PB = _round_up(nB, 128)           # 128
    PC = _round_up(nC, 128)           # 256
    PD = _round_up(nD, 128)           # 128 : lane-dense output store

    # M1 padded to P1 lanes so the in-kernel concat boundary is vreg-aligned.
    W1p = np.zeros((W1.shape[0], P1), np.float32); W1p[:, :n1] = W1
    b1p = np.zeros((P1,), np.float32); b1p[:n1] = b1

    # blockdiag(A, S2) applied to concat([x_P1 | skip_192]) -> [main_PA | skip_PA]
    WAB = np.zeros((P1 + n_skip, 2 * PA), np.float32)
    WAB[:n1, :nA] = A
    WAB[P1:P1 + n_skip, PA:PA + nA] = S2
    bAB = np.zeros((2 * PA,), np.float32)
    bAB[:nA] = bA; bAB[PA:PA + nA] = bS2

    # blockdiag(Bm, S1)
    WBS = np.zeros((2 * PA, 2 * PB), np.float32)
    WBS[:nA, :nB] = Bm
    WBS[PA:PA + nA, PB:PB + nB] = S1
    bBS = np.zeros((2 * PB,), np.float32)
    bBS[:nB] = bB; bBS[PB:PB + nB] = bS1

    # stage C with residual add + skip_norm folded: both halves hit the same
    # (scale-scaled) Cm rows; shift lands in the bias.
    WC = np.zeros((2 * PB, PC), np.float32)
    WC[:nB, :nC] = sn_scale[:, None] * Cm
    WC[PB:PB + nB, :nC] = sn_scale[:, None] * Cm
    bCf = np.zeros((PC,), np.float32)
    bCf[:nC] = sn_shift @ Cm + bC

    # stage D, lane-dense (PD = 128) output columns
    WD = np.zeros((PC, PD), np.float32)
    WD[:nC, :nD] = Dm
    bDf = np.zeros((PD,), np.float32)
    bDf[:nD] = bD

    def wdev(x):                       # MXU operands stored as bf16
        return jnp.asarray(x, jnp.bfloat16)

    def row(x):                        # bias / affine epilogue stays f32
        return jnp.asarray(x, jnp.float32).reshape(1, -1)

    params = dict(
        W2=wdev(W2), b2=row(b2),
        W1=wdev(W1p), b1=row(b1p),
        WAB=wdev(WAB), bAB=row(bAB),
        WBS=wdev(WBS), bBS=row(bBS),
        WC=wdev(WC), bC=row(bCf),
        WD=wdev(WD), bD=row(bDf),
    )
    meta = dict(out_chw=(channels, hD, wD), n_out=nD, n_out_pad=PD, n_skip=n_skip)
    return params, meta


# --------------------- pure-JAX reference (for checking) ---------------------

def _bn_eval(x, bn):
    return ((x - bn["rm"]) / jnp.sqrt(bn["rv"] + _EPS)) * bn["gamma"] + bn["beta"]


def _convT_ref(x_nhwc, w_t, b, pad_torch):
    k = w_t.shape[2]
    kern = jnp.transpose(w_t[:, :, ::-1, ::-1], (2, 3, 0, 1))   # (K,K,Cin,Cout)
    pad = k - 1 - pad_torch
    y = jax.lax.conv_general_dilated(
        x_nhwc, kern, window_strides=(1, 1),
        padding=[(pad, pad), (pad, pad)],
        dimension_numbers=("NHWC", "HWIO", "NHWC"),
        precision=jax.lax.Precision.HIGHEST)
    return y + b.reshape(1, 1, 1, -1)


def _up2(x):
    return jnp.repeat(jnp.repeat(x, 2, axis=1), 2, axis=2)


def reference_forward(p, z, skip_nchw):
    hi = jax.lax.Precision.HIGHEST
    B, s0, dc2 = z.shape[0], p["s0"], p["dc2"]
    x = jnp.dot(z, p["linear2_w"].T, precision=hi) + p["linear2_b"]
    x = jax.nn.relu(_bn_eval(x, p["bn4"]))                      # dropout = id (eval)
    x = jnp.dot(x, p["linear1_w"].T, precision=hi) + p["linear1_b"]
    x = jax.nn.relu(_bn_eval(x, p["bn3"]))
    x = x.reshape(B, dc2, s0, s0).transpose(0, 2, 3, 1)         # NHWC
    x = _up2(x)
    x = jax.nn.relu(_convT_ref(x, p["deconv2_2_w"], p["deconv2_2_b"], 1))
    x = jax.nn.relu(_bn_eval(
        _convT_ref(x, p["deconv2_1_w"], p["deconv2_1_b"], 1), p["bn1"]))
    s = skip_nchw.transpose(0, 2, 3, 1)
    s = jax.nn.relu(_convT_ref(s, p["deconv_skip_2_w"], p["deconv_skip_2_b"], 1))
    s = jax.nn.relu(_convT_ref(s, p["deconv_skip_1_w"], p["deconv_skip_1_b"], 1))
    x = _bn_eval(x + s, p["skip_norm"])
    x = _up2(x)
    x = jax.nn.relu(_convT_ref(x, p["deconv1_2_w"], p["deconv1_2_b"], 1))
    x = jnp.tanh(_convT_ref(x, p["deconv1_1_w"], p["deconv1_1_b"], 1))
    return x.transpose(0, 3, 1, 2)                               # NCHW


# --------------------------- parameter creation -------------------------------

def init_params(key, latent_dims, distance, channels):
    s0 = int(0.25 * distance + 3 / 4)
    dff, dc2, dc1 = 20, 12, 8
    keys = jax.random.split(key, 64)
    it = iter(keys)

    def rand(shape, scl=0.1):
        return (scl * jax.random.normal(next(it), shape)).astype(jnp.float32)

    def bn(n):
        return dict(
            gamma=(1.0 + rand((n,))).astype(jnp.float32),
            beta=rand((n,)),
            rm=rand((n,)),
            rv=(1.0 + 0.1 * jnp.abs(jax.random.normal(next(it), (n,)))).astype(jnp.float32),
        )

    return dict(
        s0=s0, dc2=dc2, dc1=dc1,
        linear2_w=rand((dff, latent_dims)), linear2_b=rand((dff,)),
        bn4=bn(dff),
        linear1_w=rand((dc2 * s0 * s0, dff)), linear1_b=rand((dc2 * s0 * s0,)),
        bn3=bn(dc2 * s0 * s0),
        deconv2_2_w=rand((dc2, dc2, 2, 2)), deconv2_2_b=rand((dc2,)),
        deconv2_1_w=rand((dc2, dc1, 3, 3)), deconv2_1_b=rand((dc1,)),
        bn1=bn(dc1),
        deconv_skip_2_w=rand((dc2, dc2, 2, 2)), deconv_skip_2_b=rand((dc2,)),
        deconv_skip_1_w=rand((dc2, dc1, 3, 3)), deconv_skip_1_b=rand((dc1,)),
        skip_norm=bn(dc1),
        deconv1_2_w=rand((dc1, dc1, 2, 2)), deconv1_2_b=rand((dc1,)),
        deconv1_1_w=rand((dc1, channels, 3, 3)), deconv1_1_b=rand((channels,)),
    )


# ----------------------------------- main -------------------------------------

if __name__ == "__main__":
    key = jax.random.PRNGKey(0)
    latent_dims, distance, channels, batch = 4, 5, 2, 2

    kp, kz, ks = jax.random.split(key, 3)
    raw = init_params(kp, latent_dims, distance, channels)
    s0 = raw["s0"]                                   # = 2 for distance 5

    z = jax.random.normal(kz, (batch, latent_dims), jnp.float32)
    # skip tensor (NCHW, as produced by the encoder): (B, 12, 2*s0, 2*s0)
    skip = jax.random.normal(ks, (batch, 12, 2 * s0, 2 * s0), jnp.float32)

    fused, meta = build_fused_params(raw, channels)  # offline, once

    # Weights are jit ARGUMENTS (not baked constants).
    run = jax.jit(lambda params, zz, ss: decoder_skip_forward(params, zz, ss, meta))
    out = jax.block_until_ready(run(fused, z, skip))

    C, H, W = meta["out_chw"]
    assert out.shape == (batch, channels, H, W), out.shape
    assert out.shape == (batch, channels, distance, distance), out.shape
    assert out.dtype == jnp.float32

    # numeric check against a straightforward pure-JAX eval-mode reference
    # (tolerance accounts for bf16 MXU operands; structural errors would be
    #  >10x larger)
    ref = jax.block_until_ready(reference_forward(raw, z, skip))
    max_err = float(jnp.max(jnp.abs(out - ref)))
    assert max_err < 5e-2, f"max |out - ref| = {max_err}"

    print("KERNEL_OK")
</pallas_src>

<mosaic_0001>
module attributes {stable_mosaic.version = 11 : i64} {
  func.func @_decoder_kernel(%arg0: i32, %arg1: memref<2x4xf32, #tpu.memory_space<vmem>>, %arg2: memref<2x192xf32, #tpu.memory_space<vmem>>, %arg3: memref<4x20xbf16, #tpu.memory_space<vmem>>, %arg4: memref<1x20xf32, #tpu.memory_space<vmem>>, %arg5: memref<20x128xbf16, #tpu.memory_space<vmem>>, %arg6: memref<1x128xf32, #tpu.memory_space<vmem>>, %arg7: memref<320x256xbf16, #tpu.memory_space<vmem>>, %arg8: memref<1x256xf32, #tpu.memory_space<vmem>>, %arg9: memref<256x256xbf16, #tpu.memory_space<vmem>>, %arg10: memref<1x256xf32, #tpu.memory_space<vmem>>, %arg11: memref<256x256xbf16, #tpu.memory_space<vmem>>, %arg12: memref<1x256xf32, #tpu.memory_space<vmem>>, %arg13: memref<256x128xbf16, #tpu.memory_space<vmem>>, %arg14: memref<1x128xf32, #tpu.memory_space<vmem>>, %arg15: memref<2x128xf32, #tpu.memory_space<vmem>>) attributes {dimension_semantics = [#tpu.dimension_semantics<parallel>], iteration_bounds = array<i64: 1>, scalar_prefetch = 0 : i64, scratch_operands = 0 : i64, tpu.core_type = #tpu.core_type<tc>, window_params = [{transform_indices = @transform_0, window_bounds = array<i64: 2, 4>}, {transform_indices = @transform_1, window_bounds = array<i64: 2, 192>}, {pipeline_mode = #tpu.pipeline_mode<synchronous>, transform_indices = @transform_2, window_bounds = array<i64: 4, 20>}, {pipeline_mode = #tpu.pipeline_mode<synchronous>, transform_indices = @transform_3, window_bounds = array<i64: 1, 20>}, {pipeline_mode = #tpu.pipeline_mode<synchronous>, transform_indices = @transform_4, window_bounds = array<i64: 20, 128>}, {pipeline_mode = #tpu.pipeline_mode<synchronous>, transform_indices = @transform_5, window_bounds = array<i64: 1, 128>}, {pipeline_mode = #tpu.pipeline_mode<synchronous>, transform_indices = @transform_6, window_bounds = array<i64: 320, 256>}, {pipeline_mode = #tpu.pipeline_mode<synchronous>, transform_indices = @transform_7, window_bounds = array<i64: 1, 256>}, {pipeline_mode = #tpu.pipeline_mode<synchronous>, transform_indices = @transform_8, window_bounds = array<i64: 256, 256>}, {pipeline_mode = #tpu.pipeline_mode<synchronous>, transform_indices = @transform_9, window_bounds = array<i64: 1, 256>}, {pipeline_mode = #tpu.pipeline_mode<synchronous>, transform_indices = @transform_10, window_bounds = array<i64: 256, 256>}, {pipeline_mode = #tpu.pipeline_mode<synchronous>, transform_indices = @transform_11, window_bounds = array<i64: 1, 256>}, {pipeline_mode = #tpu.pipeline_mode<synchronous>, transform_indices = @transform_12, window_bounds = array<i64: 256, 128>}, {pipeline_mode = #tpu.pipeline_mode<synchronous>, transform_indices = @transform_13, window_bounds = array<i64: 1, 128>}, {transform_indices = @transform_14, window_bounds = array<i64: 2, 128>}]} {
    %c0 = arith.constant 0 : index
    %c0_0 = arith.constant 0 : index
    %0 = vector.load %arg1[%c0, %c0_0] : memref<2x4xf32, #tpu.memory_space<vmem>>, vector<2x4xf32>
    %1 = arith.truncf %0 : vector<2x4xf32> to vector<2x4xbf16>
    %c0_1 = arith.constant 0 : index
    %c0_2 = arith.constant 0 : index
    %2 = vector.load %arg3[%c0_1, %c0_2] : memref<4x20xbf16, #tpu.memory_space<vmem>>, vector<4x20xbf16>
    %cst = arith.constant dense<0.000000e+00> : vector<2x20xf32>
    %3 = tpu.matmul %1, %2, %cst {dimension_numbers = #tpu.dot_dimension_numbers<[1], [0], [0], [1], [0, 0, 1, 1], [], []>} : vector<2x4xbf16>, vector<4x20xbf16>, vector<2x20xf32> -> vector<2x20xf32>
    %c0_3 = arith.constant 0 : index
    %c0_4 = arith.constant 0 : index
    %4 = vector.load %arg4[%c0_3, %c0_4] : memref<1x20xf32, #tpu.memory_space<vmem>>, vector<1x20xf32>
    %5 = vector.broadcast %4 : vector<1x20xf32> to vector<2x20xf32>
    %6 = arith.addf %3, %5 : vector<2x20xf32>
    %cst_5 = arith.constant 0.000000e+00 : f32
    %7 = vector.broadcast %cst_5 : f32 to vector<2x20xf32>
    %8 = arith.maximumf %6, %7 : vector<2x20xf32>
    %9 = arith.truncf %8 : vector<2x20xf32> to vector<2x20xbf16>
    %c0_6 = arith.constant 0 : index
    %c0_7 = arith.constant 0 : index
    %10 = vector.load %arg5[%c0_6, %c0_7] : memref<20x128xbf16, #tpu.memory_space<vmem>>, vector<20x128xbf16>
    %cst_8 = arith.constant dense<0.000000e+00> : vector<2x128xf32>
    %11 = tpu.matmul %9, %10, %cst_8 {dimension_numbers = #tpu.dot_dimension_numbers<[1], [0], [0], [1], [0, 0, 1, 1], [], []>} : vector<2x20xbf16>, vector<20x128xbf16>, vector<2x128xf32> -> vector<2x128xf32>
    %c0_9 = arith.constant 0 : index
    %c0_10 = arith.constant 0 : index
    %12 = vector.load %arg6[%c0_9, %c0_10] : memref<1x128xf32, #tpu.memory_space<vmem>>, vector<1x128xf32>
    %13 = vector.broadcast %12 : vector<1x128xf32> to vector<2x128xf32>
    %14 = arith.addf %11, %13 : vector<2x128xf32>
    %cst_11 = arith.constant 0.000000e+00 : f32
    %15 = vector.broadcast %cst_11 : f32 to vector<2x128xf32>
    %16 = arith.maximumf %14, %15 : vector<2x128xf32>
    %c0_12 = arith.constant 0 : index
    %c0_13 = arith.constant 0 : index
    %17 = vector.load %arg2[%c0_12, %c0_13] : memref<2x192xf32, #tpu.memory_space<vmem>>, vector<2x192xf32>
    %18 = tpu.concatenate %16, %17 in 1 : vector<2x128xf32>, vector<2x192xf32> -> vector<2x320xf32>
    %19 = arith.truncf %18 : vector<2x320xf32> to vector<2x320xbf16>
    %c0_14 = arith.constant 0 : index
    %c0_15 = arith.constant 0 : index
    %20 = vector.load %arg7[%c0_14, %c0_15] : memref<320x256xbf16, #tpu.memory_space<vmem>>, vector<320x256xbf16>
    %cst_16 = arith.constant dense<0.000000e+00> : vector<2x256xf32>
    %21 = tpu.matmul %19, %20, %cst_16 {dimension_numbers = #tpu.dot_dimension_numbers<[1], [0], [0], [1], [0, 0, 1, 1], [], []>} : vector<2x320xbf16>, vector<320x256xbf16>, vector<2x256xf32> -> vector<2x256xf32>
    %c0_17 = arith.constant 0 : index
    %c0_18 = arith.constant 0 : index
    %22 = vector.load %arg8[%c0_17, %c0_18] : memref<1x256xf32, #tpu.memory_space<vmem>>, vector<1x256xf32>
    %23 = vector.broadcast %22 : vector<1x256xf32> to vector<2x256xf32>
    %24 = arith.addf %21, %23 : vector<2x256xf32>
    %cst_19 = arith.constant 0.000000e+00 : f32
    %25 = vector.broadcast %cst_19 : f32 to vector<2x256xf32>
    %26 = arith.maximumf %24, %25 : vector<2x256xf32>
    %27 = arith.truncf %26 : vector<2x256xf32> to vector<2x256xbf16>
    %c0_20 = arith.constant 0 : index
    %c0_21 = arith.constant 0 : index
    %28 = vector.load %arg9[%c0_20, %c0_21] : memref<256x256xbf16, #tpu.memory_space<vmem>>, vector<256x256xbf16>
    %cst_22 = arith.constant dense<0.000000e+00> : vector<2x256xf32>
    %29 = tpu.matmul %27, %28, %cst_22 {dimension_numbers = #tpu.dot_dimension_numbers<[1], [0], [0], [1], [0, 0, 1, 1], [], []>} : vector<2x256xbf16>, vector<256x256xbf16>, vector<2x256xf32> -> vector<2x256xf32>
    %c0_23 = arith.constant 0 : index
    %c0_24 = arith.constant 0 : index
    %30 = vector.load %arg10[%c0_23, %c0_24] : memref<1x256xf32, #tpu.memory_space<vmem>>, vector<1x256xf32>
    %31 = vector.broadcast %30 : vector<1x256xf32> to vector<2x256xf32>
    %32 = arith.addf %29, %31 : vector<2x256xf32>
    %cst_25 = arith.constant 0.000000e+00 : f32
    %33 = vector.broadcast %cst_25 : f32 to vector<2x256xf32>
    %34 = arith.maximumf %32, %33 : vector<2x256xf32>
    %35 = arith.truncf %34 : vector<2x256xf32> to vector<2x256xbf16>
    %c0_26 = arith.constant 0 : index
    %c0_27 = arith.constant 0 : index
    %36 = vector.load %arg11[%c0_26, %c0_27] : memref<256x256xbf16, #tpu.memory_space<vmem>>, vector<256x256xbf16>
    %cst_28 = arith.constant dense<0.000000e+00> : vector<2x256xf32>
    %37 = tpu.matmul %35, %36, %cst_28 {dimension_numbers = #tpu.dot_dimension_numbers<[1], [0], [0], [1], [0, 0, 1, 1], [], []>} : vector<2x256xbf16>, vector<256x256xbf16>, vector<2x256xf32> -> vector<2x256xf32>
    %c0_29 = arith.constant 0 : index
    %c0_30 = arith.constant 0 : index
    %38 = vector.load %arg12[%c0_29, %c0_30] : memref<1x256xf32, #tpu.memory_space<vmem>>, vector<1x256xf32>
    %39 = vector.broadcast %38 : vector<1x256xf32> to vector<2x256xf32>
    %40 = arith.addf %37, %39 : vector<2x256xf32>
    %cst_31 = arith.constant 0.000000e+00 : f32
    %41 = vector.broadcast %cst_31 : f32 to vector<2x256xf32>
    %42 = arith.maximumf %40, %41 : vector<2x256xf32>
    %43 = arith.truncf %42 : vector<2x256xf32> to vector<2x256xbf16>
    %c0_32 = arith.constant 0 : index
    %c0_33 = arith.constant 0 : index
    %44 = vector.load %arg13[%c0_32, %c0_33] : memref<256x128xbf16, #tpu.memory_space<vmem>>, vector<256x128xbf16>
    %cst_34 = arith.constant dense<0.000000e+00> : vector<2x128xf32>
    %45 = tpu.matmul %43, %44, %cst_34 {dimension_numbers = #tpu.dot_dimension_numbers<[1], [0], [0], [1], [0, 0, 1, 1], [], []>} : vector<2x256xbf16>, vector<256x128xbf16>, vector<2x128xf32> -> vector<2x128xf32>
    %c0_35 = arith.constant 0 : index
    %c0_36 = arith.constant 0 : index
    %46 = vector.load %arg14[%c0_35, %c0_36] : memref<1x128xf32, #tpu.memory_space<vmem>>, vector<1x128xf32>
    %47 = vector.broadcast %46 : vector<1x128xf32> to vector<2x128xf32>
    %48 = arith.addf %45, %47 : vector<2x128xf32>
    %49 = math.tanh %48 : vector<2x128xf32>
    %c0_37 = arith.constant 0 : index
    %c0_38 = arith.constant 0 : index
    %50 = vector.load %arg15[%c0_37, %c0_38] : memref<2x128xf32, #tpu.memory_space<vmem>>, vector<2x128xf32>
    tpu.vector_store %arg15[%c0_37, %c0_38], %49 {strides = array<i32>} : memref<2x128xf32, #tpu.memory_space<vmem>>, vector<2x128xf32>,
    return
  }
  func.func @transform_0(%arg0: i32) -> (i32, i32) {
    %c0_i32 = arith.constant 0 : i32
    %c0_i32_0 = arith.constant 0 : i32
    return %arg0, %c0_i32 : i32, i32
  }
  func.func @transform_1(%arg0: i32) -> (i32, i32) {
    %c0_i32 = arith.constant 0 : i32
    %c0_i32_0 = arith.constant 0 : i32
    return %arg0, %c0_i32 : i32, i32
  }
  func.func @transform_2(%arg0: i32) -> (i32, i32) {
    %c0_i32 = arith.constant 0 : i32
    %c0_i32_0 = arith.constant 0 : i32
    %c0_i32_1 = arith.constant 0 : i32
    return %c0_i32, %c0_i32_0 : i32, i32
  }
  func.func @transform_3(%arg0: i32) -> (i32, i32) {
    %c0_i32 = arith.constant 0 : i32
    %c0_i32_0 = arith.constant 0 : i32
    %c0_i32_1 = arith.constant 0 : i32
    return %c0_i32, %c0_i32_0 : i32, i32
  }
  func.func @transform_4(%arg0: i32) -> (i32, i32) {
    %c0_i32 = arith.constant 0 : i32
    %c0_i32_0 = arith.constant 0 : i32
    %c0_i32_1 = arith.constant 0 : i32
    return %c0_i32, %c0_i32_0 : i32, i32
  }
  func.func @transform_5(%arg0: i32) -> (i32, i32) {
    %c0_i32 = arith.constant 0 : i32
    %c0_i32_0 = arith.constant 0 : i32
    %c0_i32_1 = arith.constant 0 : i32
    return %c0_i32, %c0_i32_0 : i32, i32
  }
  func.func @transform_6(%arg0: i32) -> (i32, i32) {
    %c0_i32 = arith.constant 0 : i32
    %c0_i32_0 = arith.constant 0 : i32
    %c0_i32_1 = arith.constant 0 : i32
    return %c0_i32, %c0_i32_0 : i32, i32
  }
  func.func @transform_7(%arg0: i32) -> (i32, i32) {
    %c0_i32 = arith.constant 0 : i32
    %c0_i32_0 = arith.constant 0 : i32
    %c0_i32_1 = arith.constant 0 : i32
    return %c0_i32, %c0_i32_0 : i32, i32
  }
  func.func @transform_8(%arg0: i32) -> (i32, i32) {
    %c0_i32 = arith.constant 0 : i32
    %c0_i32_0 = arith.constant 0 : i32
    %c0_i32_1 = arith.constant 0 : i32
    return %c0_i32, %c0_i32_0 : i32, i32
  }
  func.func @transform_9(%arg0: i32) -> (i32, i32) {
    %c0_i32 = arith.constant 0 : i32
    %c0_i32_0 = arith.constant 0 : i32
    %c0_i32_1 = arith.constant 0 : i32
    return %c0_i32, %c0_i32_0 : i32, i32
  }
  func.func @transform_10(%arg0: i32) -> (i32, i32) {
    %c0_i32 = arith.constant 0 : i32
    %c0_i32_0 = arith.constant 0 : i32
    %c0_i32_1 = arith.constant 0 : i32
    return %c0_i32, %c0_i32_0 : i32, i32
  }
  func.func @transform_11(%arg0: i32) -> (i32, i32) {
    %c0_i32 = arith.constant 0 : i32
    %c0_i32_0 = arith.constant 0 : i32
    %c0_i32_1 = arith.constant 0 : i32
    return %c0_i32, %c0_i32_0 : i32, i32
  }
  func.func @transform_12(%arg0: i32) -> (i32, i32) {
    %c0_i32 = arith.constant 0 : i32
    %c0_i32_0 = arith.constant 0 : i32
    %c0_i32_1 = arith.constant 0 : i32
    return %c0_i32, %c0_i32_0 : i32, i32
  }
  func.func @transform_13(%arg0: i32) -> (i32, i32) {
    %c0_i32 = arith.constant 0 : i32
    %c0_i32_0 = arith.constant 0 : i32
    %c0_i32_1 = arith.constant 0 : i32
    return %c0_i32, %c0_i32_0 : i32, i32
  }
  func.func @transform_14(%arg0: i32) -> (i32, i32) {
    %c0_i32 = arith.constant 0 : i32
    %c0_i32_0 = arith.constant 0 : i32
    return %arg0, %c0_i32 : i32, i32
  }
}

</mosaic_0001>

<llo_original>
// kernel: _lambda_.1
$region0: #{_lambda_.1}
  #allocation0 [shape = 'u32[]', space=smem, size = 0x4, offset = 0x4, fixed_abs, tag = 'smem constant byte address 0x4 - core index']
  #allocation1 [shape = 'u32[144,128]{1,0:T(1,128)}', space=vmem, size = 0x12000, scoped, tag = 'internal scratch']
  %s0 = inlined_call_operand.vmem [shape: f32[2,4], index: 0, kind: input, shape index: {}]
  %s1 = inlined_call_operand.vmem [shape: f32[2,192], index: 1, kind: input, shape index: {}]
  %s2 = inlined_call_operand.vmem [shape: bf16[4,20], index: 2, kind: input, shape index: {}]
  %s3 = inlined_call_operand.vmem [shape: f32[1,20], index: 3, kind: input, shape index: {}]
  %s4 = inlined_call_operand.vmem [shape: bf16[20,128], index: 4, kind: input, shape index: {}]
  %s5 = inlined_call_operand.vmem [shape: f32[1,128], index: 5, kind: input, shape index: {}]
  %s6 = inlined_call_operand.hbm [shape: bf16[320,256], index: 6, kind: input, shape index: {}]
  %s7 = inlined_call_operand.vmem [shape: f32[1,256], index: 7, kind: input, shape index: {}]
  %s8 = inlined_call_operand.hbm [shape: bf16[256,256], index: 8, kind: input, shape index: {}]
  %s9 = inlined_call_operand.vmem [shape: f32[1,256], index: 9, kind: input, shape index: {}]
  %s10 = inlined_call_operand.hbm [shape: bf16[256,256], index: 10, kind: input, shape index: {}]
  %s11 = inlined_call_operand.vmem [shape: f32[1,256], index: 11, kind: input, shape index: {}]
  %s12 = inlined_call_operand.vmem [shape: bf16[256,128], index: 12, kind: input, shape index: {}]
  %s13 = inlined_call_operand.vmem [shape: f32[1,128], index: 13, kind: input, shape index: {}]
  %s14 = inlined_call_operand.vmem [shape: f32[2,128], index: 14, kind: output, shape index: {}]
  %s15 = sld [smem:[#allocation0]]
  $region78: #{_lambda_.1} parent=0
    _
  %s17 = ssub.s32 1, %s15
  %s18 = scalar_select 0, %s17, %s15
  $region1: #{_lambda_.1} parent=0
    #allocation2 [shape = 'u8[163840]{0}', space=vmem, size = 0x28000, scoped, tag = 'input window, operand 6, single buffered']
    #allocation3 [shape = 's32[1]{0}', space=sflag, size = 0x4, scoped, tag = 'scoped memory for _lambda_.1']
    #allocation4 [shape = 'u8[131072]{0}', space=vmem, size = 0x20000, scoped, tag = 'input window, operand 8, single buffered']
    #allocation5 [shape = 's32[1]{0}', space=sflag, size = 0x4, scoped, tag = 'scoped memory for _lambda_.1']
    #allocation6 [shape = 'u8[131072]{0}', space=vmem, size = 0x20000, scoped, tag = 'input window, operand 10, single buffered']
    %19 = vsyncpa [#allocation3], 0
    %20 = vsyncpa [#allocation5], 0
    // Predicated region
    $region2: #{_lambda_.1} parent=1 // pred_check
      _
    $region3: #{_lambda_.1} parent=1 // pred_check_branch
      %22 = sbr.rel (0) target = $region5
    $region4: #{_lambda_.1} parent=1 // pred_region
      _
    $region5: #{_lambda_.1} parent=1 // pred_fallthru
      _
    // Predicated region
    $region6: #{_lambda_.1} parent=1 // pred_check
      _
    $region7: #{_lambda_.1} parent=1 // pred_check_branch
      %24 = sbr.rel (0) target = $region9
    $region8: #{_lambda_.1} parent=1 // pred_region
      _
    $region9: #{_lambda_.1} parent=1 // pred_fallthru
      _
    // Predicated region
    $region10: #{_lambda_.1} parent=1 // pred_check
      _
    $region11: #{_lambda_.1} parent=1 // pred_check_branch
      %26 = sbr.rel (0) target = $region13
    $region12: #{_lambda_.1} parent=1 // pred_region
      _
    $region13: #{_lambda_.1} parent=1 // pred_fallthru
      _
    // Predicated region
    $region14: #{_lambda_.1} parent=1 // pred_check
      _
    $region15: #{_lambda_.1} parent=1 // pred_check_branch
      %28 = sbr.rel (0) target = $region17
    $region16: #{_lambda_.1} parent=1 // pred_region
      _
    $region17: #{_lambda_.1} parent=1 // pred_fallthru
      _
    // Predicated region
    $region18: #{_lambda_.1} parent=1 // pred_check
      _
    $region19: #{_lambda_.1} parent=1 // pred_check_branch
      %30 = sbr.rel (0) target = $region21
    $region20: #{_lambda_.1} parent=1 // pred_region
      _
    $region21: #{_lambda_.1} parent=1 // pred_fallthru
      _
    // Predicated region
    $region22: #{_lambda_.1} parent=1 // pred_check
      _
    $region23: #{_lambda_.1} parent=1 // pred_check_branch
      %32 = sbr.rel (0) target = $region25
    $region24: #{_lambda_.1} parent=1 // pred_region
      _
    $region25: #{_lambda_.1} parent=1 // pred_fallthru
      _
    // Predicated region
    $region26: #{_lambda_.1} parent=1 // pred_check
      _
    $region27: #{_lambda_.1} parent=1 // pred_check_branch
      %34 = sbr.rel (0) target = $region29
    $region28: #{_lambda_.1} parent=1 // pred_region
      %s36 = ssub.s32 5120, 5120
      %37 = vsyncadd [#allocation3], %s36
      %s38 = sshll.u32 [#allocation2], 4
      %s39 = int_to_ptr.vmem [resolvable:$true] %s38
      %44 = dma.hbm_to_vmem [thread:$0]  %s6, 5120, %s39, [#allocation3], 128, 128, 8
    $region29: #{_lambda_.1} parent=1 // pred_fallthru
      _
    // Predicated region
    $region30: #{_lambda_.1} parent=1 // pred_check
      _
    $region31: #{_lambda_.1} parent=1 // pred_check_branch
      %46 = sbr.rel (0) target = $region33
    $region32: #{_lambda_.1} parent=1 // pred_region
      _
    $region33: #{_lambda_.1} parent=1 // pred_fallthru
      _
    // Predicated region
    $region34: #{_lambda_.1} parent=1 // pred_check
      _
    $region35: #{_lambda_.1} parent=1 // pred_check_branch
      %48 = sbr.rel (0) target = $region37
    $region36: #{_lambda_.1} parent=1 // pred_region
      %s50 = ssub.s32 4096, 4096
      %51 = vsyncadd [#allocation5], %s50
      %s52 = sshll.u32 [#allocation4], 4
      %s53 = int_to_ptr.vmem [resolvable:$true] %s52
      %58 = dma.hbm_to_vmem [thread:$0]  %s8, 4096, %s53, [#allocation5], 128, 128, 8
    $region37: #{_lambda_.1} parent=1 // pred_fallthru
      _
    // Predicated region
    $region38: #{_lambda_.1} parent=1 // pred_check
      _
    $region39: #{_lambda_.1} parent=1 // pred_check_branch
      %60 = sbr.rel (0) target = $region41
    $region40: #{_lambda_.1} parent=1 // pred_region
      _
    $region41: #{_lambda_.1} parent=1 // pred_fallthru
      _
    // Predicated region
    $region42: #{_lambda_.1} parent=1 // pred_check
      _
    $region43: #{_lambda_.1} parent=1 // pred_check_branch
      %62 = sbr.rel (0) target = $region45
    $region44: #{_lambda_.1} parent=1 // pred_region
      %s64 = ssub.s32 4096, 4096
      %65 = vsyncadd [#allocation5], %s64
      %s66 = sshll.u32 [#allocation6], 4
      %s67 = int_to_ptr.vmem [resolvable:$true] %s66
      %72 = dma.hbm_to_vmem [thread:$0]  %s10, 4096, %s67, [#allocation5], 128, 128, 8
    $region45: #{_lambda_.1} parent=1 // pred_fallthru
      _
    // Predicated region
    $region46: #{_lambda_.1} parent=1 // pred_check
      _
    $region47: #{_lambda_.1} parent=1 // pred_check_branch
      %74 = sbr.rel (0) target = $region49
    $region48: #{_lambda_.1} parent=1 // pred_region
      _
    $region49: #{_lambda_.1} parent=1 // pred_fallthru
      _
    // Predicated region
    $region50: #{_lambda_.1} parent=1 // pred_check
      _
    $region51: #{_lambda_.1} parent=1 // pred_check_branch
      %76 = sbr.rel (0) target = $region53
    $region52: #{_lambda_.1} parent=1 // pred_region
      _
    $region53: #{_lambda_.1} parent=1 // pred_fallthru
      _
    // Predicated region
    $region54: #{_lambda_.1} parent=1 // pred_check
      _
    $region55: #{_lambda_.1} parent=1 // pred_check_branch
      %78 = sbr.rel (0) target = $region57
    $region56: #{_lambda_.1} parent=1 // pred_region
      _
    $region57: #{_lambda_.1} parent=1 // pred_fallthru
      _
    // Predicated region
    $region58: #{_lambda_.1} parent=1 // pred_check
      _
    $region59: #{_lambda_.1} parent=1 // pred_check_branch
      %80 = sbr.rel (0) target = $region61
    $region60: #{_lambda_.1} parent=1 // pred_region
      %81 = dma.done [#allocation3], 5120
    $region61: #{_lambda_.1} parent=1 // pred_fallthru
      _
    // Predicated region
    $region62: #{_lambda_.1} parent=1 // pred_check
      _
    $region63: #{_lambda_.1} parent=1 // pred_check_branch
      %83 = sbr.rel (0) target = $region65
    $region64: #{_lambda_.1} parent=1 // pred_region
      %84 = dma.done [#allocation5], 4096
    $region65: #{_lambda_.1} parent=1 // pred_fallthru
      _
    // Predicated region
    $region66: #{_lambda_.1} parent=1 // pred_check
      _
    $region67: #{_lambda_.1} parent=1 // pred_check_branch
      %86 = sbr.rel (0) target = $region69
    $region68: #{_lambda_.1} parent=1 // pred_region
      %87 = dma.done [#allocation5], 4096
    $region69: #{_lambda_.1} parent=1 // pred_fallthru
      _
    %v89 = vld [vmem:[%s0] sm:$0x3]
    %v90 = vpack.c.bf16 %v89, %v89
    %v91 = vld [vmem:[%s2] sm:$0x3]
    %v92 = vld [vmem:[%s3] sm:$0x1]
    %v94 = vlaneseq
    %v95 = vshrl.u32 %v94, 7
    %v96 = vsub.s32 0, %v95
    %v97 = vrot.slane %v92, %v96
    %vm99 = vcmask 31744
    %v101 = vsel %vm99, %v90, 0
    %vm103 = vcmask 1041408
    %v105 = vsel %vm103, %v91, 0
    %107 = vmatprep.subr.bf16.mxu0 0
    %108 = vmatpush1.bf16.msra.mxu0 0
    %109 = vmatprep.subr.bf16.mxu0 0
    %110 = vmatpush1.bf16.msra.mxu0 0
    %111 = vmatprep.subr.bf16.mxu0 0
    %112 = vmatpush1.bf16.msra.mxu0 0
    %113 = vmatprep.subr.bf16.mxu0 0
    %114 = vmatpush1.bf16.msra.mxu0 0
    %115 = vmatprep.subr.bf16.mxu0 0
    %116 = vmatpush1.bf16.msra.mxu0 0
    %117 = vmatprep.subr.bf16.mxu0 0
    %118 = vmatpush1.bf16.msra.mxu0 0
    %119 = vmatprep.subr.bf16.mxu0 0
    %120 = vmatpush1.bf16.msra.mxu0 0
    %121 = vmatprep.subr.bf16.mxu0 0
    %122 = vmatpush1.bf16.msra.mxu0 %v105
    %123 = vmatprep.subr.bf16.mxu0 0
    %124 = vmatpush2.bf16.msra.mxu0 0
    %125 = vmatprep.subr.bf16.mxu0 0
    %126 = vmatpush2.bf16.msra.mxu0 0
    %127 = vmatprep.subr.bf16.mxu0 0
    %128 = vmatpush2.bf16.msra.mxu0 0
    %129 = vmatprep.subr.bf16.mxu0 0
    %130 = vmatpush2.bf16.msra.mxu0 0
    %131 = vmatprep.subr.bf16.mxu0 0
    %132 = vmatpush2.bf16.msra.mxu0 0
    %133 = vmatprep.subr.bf16.mxu0 0
    %134 = vmatpush2.bf16.msra.mxu0 0
    %135 = vmatprep.subr.bf16.mxu0 0
    %136 = vmatpush2.bf16.msra.mxu0 0
    %137 = vmatprep.subr.bf16.mxu0 0
    %138 = vmatpush2.bf16.msra.mxu0 0
    %139 = vmatprep.mubr.bf16.mxu0 0
    %140 = vmatmul.mubr.bf16.gmra.mxu0 %v101
    %v141 = vpop.f32.mrf.mxu0
    %v142 = vadd.f32 %v97, %v141
    %v143 = vpop.f32.mrf.mxu0
    %v144 = vpop.f32.mrf.mxu0
    %v145 = vpop.f32.mrf.mxu0
    %146 = vdwg.mxu0
    %v147 = vmax.f32 %v142, 0.0
    %v148 = vpack.c.bf16 %v147, %v147
    %v149 = vld [vmem:[%s4] sm:$0xf]
    %v150 = vld [vmem:[%s4 + $0x4] sm:$0xf]
    %v151 = vld [vmem:[%s4 + $0x8] sm:$0x3]
    %v152 = vld [vmem:[%s5] sm:$0x1]
    %v154 = vlaneseq
    %v155 = vshrl.u32 %v154, 7
    %v156 = vsub.s32 0, %v155
    %v157 = vrot.slane %v152, %v156
    %v162 = vunpack.c.l.b16 %v149
    %v163 = vunpack.c.l.b16 %v150
    %v164 = vunpack.c.l.b16 %v151
    %v165 = vpack.c.b16 %v163, %v162
    %v166 = vpack.c.b16 %v164, %v164
    %vm168 = vcmask 162816
    %v170 = vsel %vm168, %v148, 0
    %v173 = vsel %vm103, %v166, 0
    %175 = vmatprep.subr.bf16.mxu0 0
    %176 = vmatpush1.bf16.msra.mxu0 0
    %177 = vmatprep.subr.bf16.mxu0 0
    %178 = vmatpush1.bf16.msra.mxu0 0
    %179 = vmatprep.subr.bf16.mxu0 0
    %180 = vmatpush1.bf16.msra.mxu0 0
    %181 = vmatprep.subr.bf16.mxu0 0
    %182 = vmatpush1.bf16.msra.mxu0 0
    %183 = vmatprep.subr.bf16.mxu0 0
    %184 = vmatpush1.bf16.msra.mxu0 0
    %185 = vmatprep.subr.bf16.mxu0 0
    %186 = vmatpush1.bf16.msra.mxu0 0
    %187 = vmatprep.subr.bf16.mxu0 0
    %188 = vmatpush1.bf16.msra.mxu0 %v173
    %189 = vmatprep.subr.bf16.mxu0 0
    %190 = vmatpush1.bf16.msra.mxu0 %v165
    %191 = vmatprep.subr.bf16.mxu0 0
    %192 = vmatpush2.bf16.msra.mxu0 0
    %193 = vmatprep.subr.bf16.mxu0 0
    %194 = vmatpush2.bf16.msra.mxu0 0
    %195 = vmatprep.subr.bf16.mxu0 0
    %196 = vmatpush2.bf16.msra.mxu0 0
    %197 = vmatprep.subr.bf16.mxu0 0
    %198 = vmatpush2.bf16.msra.mxu0 0
    %199 = vmatprep.subr.bf16.mxu0 0
    %200 = vmatpush2.bf16.msra.mxu0 0
    %201 = vmatprep.subr.bf16.mxu0 0
    %202 = vmatpush2.bf16.msra.mxu0 0
    %203 = vmatprep.subr.bf16.mxu0 0
    %204 = vmatpush2.bf16.msra.mxu0 0
    %205 = vmatprep.subr.bf16.mxu0 0
    %206 = vmatpush2.bf16.msra.mxu0 0
    %207 = vmatprep.mubr.bf16.mxu0 0
    %208 = vmatmul.mubr.bf16.gmra.mxu0 %v170
    %v209 = vpop.f32.mrf.mxu0
    %v210 = vadd.f32 %v157, %v209
    %v211 = vpop.f32.mrf.mxu0
    %v212 = vpop.f32.mrf.mxu0
    %v213 = vpop.f32.mrf.mxu0
    %214 = vdwg.mxu0
    %v215 = vmax.f32 %v210, 0.0
    %v216 = vld [vmem:[%s1] sm:$0xf]
    %v219 = vunpack.c.l.s4 1983009808
    %v220 = vunpack.c.0.s8 %v219
    %v221 = vlaneseq
    %v222 = vshrl.u32 %v221, 7
    %v223 = vsub.s32 %v220, %v222
    %v224 = vrot.slane %v216, %v223
    %v225 = vcombine.high %v224, %v224
    %v228 = vpack.c.bf16 %v215, %v215
    %v229 = vpack.c.bf16 %v224, %v224
    %v230 = vpack.c.bf16 %v225, %v225
    %v231 = vld [vmem:[#allocation2] sm:$0xff]
    %v232 = vld [vmem:[#allocation2 + $0x8] sm:$0xff]
    %v233 = vld [vmem:[#allocation2 + $0x10] sm:$0xff]
    %v234 = vld [vmem:[#allocation2 + $0x18] sm:$0xff]
    %v235 = vld [vmem:[#allocation2 + $0x20] sm:$0xff]
    %v236 = vld [vmem:[#allocation2 + $0x28] sm:$0xff]
    %v237 = vld [vmem:[#allocation2 + $0x30] sm:$0xff]
    %v238 = vld [vmem:[#allocation2 + $0x38] sm:$0xff]
    %v239 = vld [vmem:[#allocation2 + $0x40] sm:$0xff]
    %v240 = vld [vmem:[#allocation2 + $0x48] sm:$0xff]
    %v241 = vld [vmem:[#allocation2 + $0x50] sm:$0xff]
    %v242 = vld [vmem:[#allocation2 + $0x58] sm:$0xff]
    %v243 = vld [vmem:[#allocation2 + $0x60] sm:$0xff]
    %v244 = vld [vmem:[#allocation2 + $0x68] sm:$0xff]
    %v245 = vld [vmem:[#allocation2 + $0x70] sm:$0xff]
    %v246 = vld [vmem:[#allocation2 + $0x78] sm:$0xff]
    %v247 = vld [vmem:[#allocation2 + $0x80] sm:$0xff]
    %v248 = vld [vmem:[#allocation2 + $0x88] sm:$0xff]
    %v249 = vld [vmem:[#allocation2 + $0x90] sm:$0xff]
    %v250 = vld [vmem:[#allocation2 + $0x98] sm:$0xff]
    %v251 = vld [vmem:[#allocation2 + $0xa0] sm:$0xff]
    %v252 = vld [vmem:[#allocation2 + $0xa8] sm:$0xff]
    %v253 = vld [vmem:[#allocation2 + $0xb0] sm:$0xff]
    %v254 = vld [vmem:[#allocation2 + $0xb8] sm:$0xff]
    %v255 = vld [vmem:[#allocation2 + $0xc0] sm:$0xff]
    %v256 = vld [vmem:[#allocation2 + $0xc8] sm:$0xff]
    %v257 = vld [vmem:[#allocation2 + $0xd0] sm:$0xff]
    %v258 = vld [vmem:[#allocation2 + $0xd8] sm:$0xff]
    %v259 = vld [vmem:[#allocation2 + $0xe0] sm:$0xff]
    %v260 = vld [vmem:[#allocation2 + $0xe8] sm:$0xff]
    %v261 = vld [vmem:[#allocation2 + $0xf0] sm:$0xff]
    %v262 = vld [vmem:[#allocation2 + $0xf8] sm:$0xff]
    %v263 = vld [vmem:[#allocation2 + $0x100] sm:$0xff]
    %v264 = vld [vmem:[#allocation2 + $0x108] sm:$0xff]
    %v265 = vld [vmem:[#allocation2 + $0x110] sm:$0xff]
    %v266 = vld [vmem:[#allocation2 + $0x118] sm:$0xff]
    %v267 = vld [vmem:[#allocation2 + $0x120] sm:$0xff]
    %v268 = vld [vmem:[#allocation2 + $0x128] sm:$0xff]
    %v269 = vld [vmem:[#allocation2 + $0x130] sm:$0xff]
    %v270 = vld [vmem:[#allocation2 + $0x138] sm:$0xff]
    %v271 = vld [vmem:[%s7] sm:$0x3]
    %v273 = vlaneseq
    %v274 = vshrl.u32 %v273, 7
    %v275 = vsub.s32 0, %v274
    %v276 = vrot.slane %v271, %v275
    %v277 = vlaneseq
    %v278 = vshrl.u32 %v277, 7
    %v279 = vsub.s32 1, %v278
    %v280 = vrot.slane %v271, %v279
    %v323 = vunpack.c.l.b16 %v231
    %v324 = vunpack.c.h.b16 %v231
    %v325 = vunpack.c.l.b16 %v232
    %v326 = vunpack.c.h.b16 %v232
    %v327 = vunpack.c.l.b16 %v233
    %v328 = vunpack.c.h.b16 %v233
    %v329 = vunpack.c.l.b16 %v234
    %v330 = vunpack.c.h.b16 %v234
    %v331 = vunpack.c.l.b16 %v235
    %v332 = vunpack.c.h.b16 %v235
    %v333 = vunpack.c.l.b16 %v236
    %v334 = vunpack.c.h.b16 %v236
    %v335 = vunpack.c.l.b16 %v237
    %v336 = vunpack.c.h.b16 %v237
    %v337 = vunpack.c.l.b16 %v238
    %v338 = vunpack.c.h.b16 %v238
    %v339 = vunpack.c.l.b16 %v239
    %v340 = vunpack.c.h.b16 %v239
    %v341 = vunpack.c.l.b16 %v240
    %v342 = vunpack.c.h.b16 %v240
    %v343 = vunpack.c.l.b16 %v241
    %v344 = vunpack.c.h.b16 %v241
    %v345 = vunpack.c.l.b16 %v242
    %v346 = vunpack.c.h.b16 %v242
    %v347 = vunpack.c.l.b16 %v243
    %v348 = vunpack.c.h.b16 %v243
    %v349 = vunpack.c.l.b16 %v244
    %v350 = vunpack.c.h.b16 %v244
    %v351 = vunpack.c.l.b16 %v245
    %v352 = vunpack.c.h.b16 %v245
    %v353 = vunpack.c.l.b16 %v246
    %v354 = vunpack.c.h.b16 %v246
    %v355 = vunpack.c.l.b16 %v247
    %v356 = vunpack.c.h.b16 %v247
    %v357 = vunpack.c.l.b16 %v248
    %v358 = vunpack.c.h.b16 %v248
    %v359 = vunpack.c.l.b16 %v249
    %v360 = vunpack.c.h.b16 %v249
    %v361 = vunpack.c.l.b16 %v250
    %v362 = vunpack.c.h.b16 %v250
    %v363 = vunpack.c.l.b16 %v251
    %v364 = vunpack.c.h.b16 %v251
    %v365 = vunpack.c.l.b16 %v252
    %v366 = vunpack.c.h.b16 %v252
    %v367 = vunpack.c.l.b16 %v253
    %v368 = vunpack.c.h.b16 %v253
    %v369 = vunpack.c.l.b16 %v254
    %v370 = vunpack.c.h.b16 %v254
    %v371 = vunpack.c.l.b16 %v255
    %v372 = vunpack.c.h.b16 %v255
    %v373 = vunpack.c.l.b16 %v256
    %v374 = vunpack.c.h.b16 %v256
    %v375 = vunpack.c.l.b16 %v257
    %v376 = vunpack.c.h.b16 %v257
    %v377 = vunpack.c.l.b16 %v258
    %v378 = vunpack.c.h.b16 %v258
    %v379 = vunpack.c.l.b16 %v259
    %v380 = vunpack.c.h.b16 %v259
    %v381 = vunpack.c.l.b16 %v260
    %v382 = vunpack.c.h.b16 %v260
    %v383 = vunpack.c.l.b16 %v261
    %v384 = vunpack.c.h.b16 %v261
    %v385 = vunpack.c.l.b16 %v262
    %v386 = vunpack.c.h.b16 %v262
    %v387 = vunpack.c.l.b16 %v263
    %v388 = vunpack.c.h.b16 %v263
    %v389 = vunpack.c.l.b16 %v264
    %v390 = vunpack.c.h.b16 %v264
    %v391 = vunpack.c.l.b16 %v265
    %v392 = vunpack.c.h.b16 %v265
    %v393 = vunpack.c.l.b16 %v266
    %v394 = vunpack.c.h.b16 %v266
    %v395 = vunpack.c.l.b16 %v267
    %v396 = vunpack.c.h.b16 %v267
    %v397 = vunpack.c.l.b16 %v268
    %v398 = vunpack.c.h.b16 %v268
    %v399 = vunpack.c.l.b16 %v269
    %v400 = vunpack.c.h.b16 %v269
    %v401 = vunpack.c.l.b16 %v270
    %v402 = vunpack.c.h.b16 %v270
    %v403 = vpack.c.b16 %v325, %v323
    %v404 = vpack.c.b16 %v326, %v324
    %v405 = vpack.c.b16 %v329, %v327
    %v406 = vpack.c.b16 %v330, %v328
    %v407 = vpack.c.b16 %v333, %v331
    %v408 = vpack.c.b16 %v334, %v332
    %v409 = vpack.c.b16 %v337, %v335
    %v410 = vpack.c.b16 %v338, %v336
    %v411 = vpack.c.b16 %v341, %v339
    %v412 = vpack.c.b16 %v342, %v340
    %v413 = vpack.c.b16 %v345, %v343
    %v414 = vpack.c.b16 %v346, %v344
    %v415 = vpack.c.b16 %v349, %v347
    %v416 = vpack.c.b16 %v350, %v348
    %v417 = vpack.c.b16 %v353, %v351
    %v418 = vpack.c.b16 %v354, %v352
    %v419 = vpack.c.b16 %v357, %v355
    %v420 = vpack.c.b16 %v358, %v356
    %v421 = vpack.c.b16 %v361, %v359
    %v422 = vpack.c.b16 %v362, %v360
    %v423 = vpack.c.b16 %v365, %v363
    %v424 = vpack.c.b16 %v366, %v364
    %v425 = vpack.c.b16 %v369, %v367
    %v426 = vpack.c.b16 %v370, %v368
    %v427 = vpack.c.b16 %v373, %v371
    %v428 = vpack.c.b16 %v374, %v372
    %v429 = vpack.c.b16 %v377, %v375
    %v430 = vpack.c.b16 %v378, %v376
    %v431 = vpack.c.b16 %v381, %v379
    %v432 = vpack.c.b16 %v382, %v380
    %v433 = vpack.c.b16 %v385, %v383
    %v434 = vpack.c.b16 %v386, %v384
    %v435 = vpack.c.b16 %v389, %v387
    %v436 = vpack.c.b16 %v390, %v388
    %v437 = vpack.c.b16 %v393, %v391
    %v438 = vpack.c.b16 %v394, %v392
    %v439 = vpack.c.b16 %v397, %v395
    %v440 = vpack.c.b16 %v398, %v396
    %v441 = vpack.c.b16 %v401, %v399
    %v442 = vpack.c.b16 %v402, %v400
    %vm483 = vcmask 523264
    %v485 = vsel %vm483, %v230, 0
    %487 = vmatprep.subr.bf16.mxu0 %v418
    %488 = vmatpush1.bf16.msra.mxu0 %v417
    %489 = vmatprep.subr.bf16.mxu0 %v416
    %490 = vmatpush1.bf16.msra.mxu0 %v415
    %491 = vmatprep.subr.bf16.mxu0 %v414
    %492 = vmatpush1.bf16.msra.mxu0 %v413
    %493 = vmatprep.subr.bf16.mxu0 %v412
    %494 = vmatpush1.bf16.msra.mxu0 %v411
    %495 = vmatprep.subr.bf16.mxu0 %v410
    %496 = vmatpush1.bf16.msra.mxu0 %v409
    %497 = vmatprep.subr.bf16.mxu0 %v408
    %498 = vmatpush1.bf16.msra.mxu0 %v407
    %499 = vmatprep.subr.bf16.mxu0 %v406
    %500 = vmatpush1.bf16.msra.mxu0 %v405
    %501 = vmatprep.subr.bf16.mxu0 %v404
    %502 = vmatpush1.bf16.msra.mxu0 %v403
    %503 = vmatprep.subr.bf16.mxu0 %v434
    %504 = vmatpush2.bf16.msra.mxu0 %v433
    %505 = vmatprep.subr.bf16.mxu0 %v432
    %506 = vmatpush2.bf16.msra.mxu0 %v431
    %507 = vmatprep.subr.bf16.mxu0 %v430
    %508 = vmatpush2.bf16.msra.mxu0 %v429
    %509 = vmatprep.subr.bf16.mxu0 %v428
    %510 = vmatpush2.bf16.msra.mxu0 %v427
    %511 = vmatprep.subr.bf16.mxu0 %v426
    %512 = vmatpush2.bf16.msra.mxu0 %v425
    %513 = vmatprep.subr.bf16.mxu0 %v424
    %514 = vmatpush2.bf16.msra.mxu0 %v423
    %515 = vmatprep.subr.bf16.mxu0 %v422
    %516 = vmatpush2.bf16.msra.mxu0 %v421
    %517 = vmatprep.subr.bf16.mxu0 %v420
    %518 = vmatpush2.bf16.msra.mxu0 %v419
    %519 = vmatprep.mubr.bf16.mxu0 %v229
    %520 = vmatmul.mubr.bf16.gmra.mxu0 %v228
    %v521 = vpop.f32.mrf.mxu0
    %v522 = vadd.f32 %v276, %v521
    %v523 = vpop.f32.mrf.mxu0
    %v524 = vadd.f32 %v280, %v523
    %v525 = vpop.f32.mrf.mxu0
    %v526 = vpop.f32.mrf.mxu0
    %527 = vdwg.mxu0
    %528 = vmatprep.subr.bf16.mxu0 0
    %529 = vmatpush1.bf16.msra.mxu0 0
    %530 = vmatprep.subr.bf16.mxu0 0
    %531 = vmatpush1.bf16.msra.mxu0 0
    %532 = vmatprep.subr.bf16.mxu0 0
    %533 = vmatpush1.bf16.msra.mxu0 0
    %534 = vmatprep.subr.bf16.mxu0 0
    %535 = vmatpush1.bf16.msra.mxu0 0
    %536 = vmatprep.subr.bf16.mxu0 %v442
    %537 = vmatpush1.bf16.msra.mxu0 %v441
    %538 = vmatprep.subr.bf16.mxu0 %v440
    %539 = vmatpush1.bf16.msra.mxu0 %v439
    %540 = vmatprep.subr.bf16.mxu0 %v438
    %541 = vmatpush1.bf16.msra.mxu0 %v437
    %542 = vmatprep.subr.bf16.mxu0 %v436
    %543 = vmatpush1.bf16.msra.mxu0 %v435
    %544 = vmatprep.subr.bf16.mxu0 0
    %545 = vmatpush2.bf16.msra.mxu0 0
    %546 = vmatprep.subr.bf16.mxu0 0
    %547 = vmatpush2.bf16.msra.mxu0 0
    %548 = vmatprep.subr.bf16.mxu0 0
    %549 = vmatpush2.bf16.msra.mxu0 0
    %550 = vmatprep.subr.bf16.mxu0 0
    %551 = vmatpush2.bf16.msra.mxu0 0
    %552 = vmatprep.subr.bf16.mxu0 0
    %553 = vmatpush2.bf16.msra.mxu0 0
    %554 = vmatprep.subr.bf16.mxu0 0
    %555 = vmatpush2.bf16.msra.mxu0 0
    %556 = vmatprep.subr.bf16.mxu0 0
    %557 = vmatpush2.bf16.msra.mxu0 0
    %558 = vmatprep.subr.bf16.mxu0 0
    %559 = vmatpush2.bf16.msra.mxu0 0
    %560 = vmatprep.mubr.bf16.mxu0 0
    %561 = vmatmul.mubr.bf16.gmra.mxu0 %v485
    %v562 = vpop.f32.mrf.mxu0
    %v563 = vadd.f32 %v522, %v562
    %v564 = vpop.f32.mrf.mxu0
    %v565 = vadd.f32 %v524, %v564
    %v566 = vpop.f32.mrf.mxu0
    %v567 = vpop.f32.mrf.mxu0
    %568 = vdwg.mxu0
    %v569 = vmax.f32 %v563, 0.0
    %v570 = vmax.f32 %v565, 0.0
    %v571 = vpack.c.bf16 %v569, %v569
    %v572 = vpack.c.bf16 %v570, %v570
    %v573 = vld [vmem:[#allocation4] sm:$0xff]
    %v574 = vld [vmem:[#allocation4 + $0x8] sm:$0xff]
    %v575 = vld [vmem:[#allocation4 + $0x10] sm:$0xff]
    %v576 = vld [vmem:[#allocation4 + $0x18] sm:$0xff]
    %v577 = vld [vmem:[#allocation4 + $0x20] sm:$0xff]
    %v578 = vld [vmem:[#allocation4 + $0x28] sm:$0xff]
    %v579 = vld [vmem:[#allocation4 + $0x30] sm:$0xff]
    %v580 = vld [vmem:[#allocation4 + $0x38] sm:$0xff]
    %v581 = vld [vmem:[#allocation4 + $0x40] sm:$0xff]
    %v582 = vld [vmem:[#allocation4 + $0x48] sm:$0xff]
    %v583 = vld [vmem:[#allocation4 + $0x50] sm:$0xff]
    %v584 = vld [vmem:[#allocation4 + $0x58] sm:$0xff]
    %v585 = vld [vmem:[#allocation4 + $0x60] sm:$0xff]
    %v586 = vld [vmem:[#allocation4 + $0x68] sm:$0xff]
    %v587 = vld [vmem:[#allocation4 + $0x70] sm:$0xff]
    %v588 = vld [vmem:[#allocation4 + $0x78] sm:$0xff]
    %v589 = vld [vmem:[#allocation4 + $0x80] sm:$0xff]
    %v590 = vld [vmem:[#allocation4 + $0x88] sm:$0xff]
    %v591 = vld [vmem:[#allocation4 + $0x90] sm:$0xff]
    %v592 = vld [vmem:[#allocation4 + $0x98] sm:$0xff]
    %v593 = vld [vmem:[#allocation4 + $0xa0] sm:$0xff]
    %v594 = vld [vmem:[#allocation4 + $0xa8] sm:$0xff]
    %v595 = vld [vmem:[#allocation4 + $0xb0] sm:$0xff]
    %v596 = vld [vmem:[#allocation4 + $0xb8] sm:$0xff]
    %v597 = vld [vmem:[#allocation4 + $0xc0] sm:$0xff]
    %v598 = vld [vmem:[#allocation4 + $0xc8] sm:$0xff]
    %v599 = vld [vmem:[#allocation4 + $0xd0] sm:$0xff]
    %v600 = vld [vmem:[#allocation4 + $0xd8] sm:$0xff]
    %v601 = vld [vmem:[#allocation4 + $0xe0] sm:$0xff]
    %v602 = vld [vmem:[#allocation4 + $0xe8] sm:$0xff]
    %v603 = vld [vmem:[#allocation4 + $0xf0] sm:$0xff]
    %v604 = vld [vmem:[#allocation4 + $0xf8] sm:$0xff]
    %v605 = vld [vmem:[%s9] sm:$0x3]
    %v607 = vlaneseq
    %v608 = vshrl.u32 %v607, 7
    %v609 = vsub.s32 0, %v608
    %v610 = vrot.slane %v605, %v609
    %v611 = vlaneseq
    %v612 = vshrl.u32 %v611, 7
    %v613 = vsub.s32 1, %v612
    %v614 = vrot.slane %v605, %v613
    %v649 = vunpack.c.l.b16 %v573
    %v650 = vunpack.c.h.b16 %v573
    %v651 = vunpack.c.l.b16 %v574
    %v652 = vunpack.c.h.b16 %v574
    %v653 = vunpack.c.l.b16 %v575
    %v654 = vunpack.c.h.b16 %v575
    %v655 = vunpack.c.l.b16 %v576
    %v656 = vunpack.c.h.b16 %v576
    %v657 = vunpack.c.l.b16 %v577
    %v658 = vunpack.c.h.b16 %v577
    %v659 = vunpack.c.l.b16 %v578
    %v660 = vunpack.c.h.b16 %v578
    %v661 = vunpack.c.l.b16 %v579
    %v662 = vunpack.c.h.b16 %v579
    %v663 = vunpack.c.l.b16 %v580
    %v664 = vunpack.c.h.b16 %v580
    %v665 = vunpack.c.l.b16 %v581
    %v666 = vunpack.c.h.b16 %v581
    %v667 = vunpack.c.l.b16 %v582
    %v668 = vunpack.c.h.b16 %v582
    %v669 = vunpack.c.l.b16 %v583
    %v670 = vunpack.c.h.b16 %v583
    %v671 = vunpack.c.l.b16 %v584
    %v672 = vunpack.c.h.b16 %v584
    %v673 = vunpack.c.l.b16 %v585
    %v674 = vunpack.c.h.b16 %v585
    %v675 = vunpack.c.l.b16 %v586
    %v676 = vunpack.c.h.b16 %v586
    %v677 = vunpack.c.l.b16 %v587
    %v678 = vunpack.c.h.b16 %v587
    %v679 = vunpack.c.l.b16 %v588
    %v680 = vunpack.c.h.b16 %v588
    %v681 = vunpack.c.l.b16 %v589
    %v682 = vunpack.c.h.b16 %v589
    %v683 = vunpack.c.l.b16 %v590
    %v684 = vunpack.c.h.b16 %v590
    %v685 = vunpack.c.l.b16 %v591
    %v686 = vunpack.c.h.b16 %v591
    %v687 = vunpack.c.l.b16 %v592
    %v688 = vunpack.c.h.b16 %v592
    %v689 = vunpack.c.l.b16 %v593
    %v690 = vunpack.c.h.b16 %v593
    %v691 = vunpack.c.l.b16 %v594
    %v692 = vunpack.c.h.b16 %v594
    %v693 = vunpack.c.l.b16 %v595
    %v694 = vunpack.c.h.b16 %v595
    %v695 = vunpack.c.l.b16 %v596
    %v696 = vunpack.c.h.b16 %v596
    %v697 = vunpack.c.l.b16 %v597
    %v698 = vunpack.c.h.b16 %v597
    %v699 = vunpack.c.l.b16 %v598
    %v700 = vunpack.c.h.b16 %v598
    %v701 = vunpack.c.l.b16 %v599
    %v702 = vunpack.c.h.b16 %v599
    %v703 = vunpack.c.l.b16 %v600
    %v704 = vunpack.c.h.b16 %v600
    %v705 = vunpack.c.l.b16 %v601
    %v706 = vunpack.c.h.b16 %v601
    %v707 = vunpack.c.l.b16 %v602
    %v708 = vunpack.c.h.b16 %v602
    %v709 = vunpack.c.l.b16 %v603
    %v710 = vunpack.c.h.b16 %v603
    %v711 = vunpack.c.l.b16 %v604
    %v712 = vunpack.c.h.b16 %v604
    %v713 = vpack.c.b16 %v651, %v649
    %v714 = vpack.c.b16 %v652, %v650
    %v715 = vpack.c.b16 %v655, %v653
    %v716 = vpack.c.b16 %v656, %v654
    %v717 = vpack.c.b16 %v659, %v657
    %v718 = vpack.c.b16 %v660, %v658
    %v719 = vpack.c.b16 %v663, %v661
    %v720 = vpack.c.b16 %v664, %v662
    %v721 = vpack.c.b16 %v667, %v665
    %v722 = vpack.c.b16 %v668, %v666
    %v723 = vpack.c.b16 %v671, %v669
    %v724 = vpack.c.b16 %v672, %v670
    %v725 = vpack.c.b16 %v675, %v673
    %v726 = vpack.c.b16 %v676, %v674
    %v727 = vpack.c.b16 %v679, %v677
    %v728 = vpack.c.b16 %v680, %v678
    %v729 = vpack.c.b16 %v683, %v681
    %v730 = vpack.c.b16 %v684, %v682
    %v731 = vpack.c.b16 %v687, %v685
    %v732 = vpack.c.b16 %v688, %v686
    %v733 = vpack.c.b16 %v691, %v689
    %v734 = vpack.c.b16 %v692, %v690
    %v735 = vpack.c.b16 %v695, %v693
    %v736 = vpack.c.b16 %v696, %v694
    %v737 = vpack.c.b16 %v699, %v697
    %v738 = vpack.c.b16 %v700, %v698
    %v739 = vpack.c.b16 %v703, %v701
    %v740 = vpack.c.b16 %v704, %v702
    %v741 = vpack.c.b16 %v707, %v705
    %v742 = vpack.c.b16 %v708, %v706
    %v743 = vpack.c.b16 %v711, %v709
    %v744 = vpack.c.b16 %v712, %v710
    %777 = vmatprep.subr.bf16.mxu0 %v728
    %778 = vmatpush1.bf16.msra.mxu0 %v727
    %779 = vmatprep.subr.bf16.mxu0 %v726
    %780 = vmatpush1.bf16.msra.mxu0 %v725
    %781 = vmatprep.subr.bf16.mxu0 %v724
    %782 = vmatpush1.bf16.msra.mxu0 %v723
    %783 = vmatprep.subr.bf16.mxu0 %v722
    %784 = vmatpush1.bf16.msra.mxu0 %v721
    %785 = vmatprep.subr.bf16.mxu0 %v720
    %786 = vmatpush1.bf16.msra.mxu0 %v719
    %787 = vmatprep.subr.bf16.mxu0 %v718
    %788 = vmatpush1.bf16.msra.mxu0 %v717
    %789 = vmatprep.subr.bf16.mxu0 %v716
    %790 = vmatpush1.bf16.msra.mxu0 %v715
    %791 = vmatprep.subr.bf16.mxu0 %v714
    %792 = vmatpush1.bf16.msra.mxu0 %v713
    %793 = vmatprep.subr.bf16.mxu0 %v744
    %794 = vmatpush2.bf16.msra.mxu0 %v743
    %795 = vmatprep.subr.bf16.mxu0 %v742
    %796 = vmatpush2.bf16.msra.mxu0 %v741
    %797 = vmatprep.subr.bf16.mxu0 %v740
    %798 = vmatpush2.bf16.msra.mxu0 %v739
    %799 = vmatprep.subr.bf16.mxu0 %v738
    %800 = vmatpush2.bf16.msra.mxu0 %v737
    %801 = vmatprep.subr.bf16.mxu0 %v736
    %802 = vmatpush2.bf16.msra.mxu0 %v735
    %803 = vmatprep.subr.bf16.mxu0 %v734
    %804 = vmatpush2.bf16.msra.mxu0 %v733
    %805 = vmatprep.subr.bf16.mxu0 %v732
    %806 = vmatpush2.bf16.msra.mxu0 %v731
    %807 = vmatprep.subr.bf16.mxu0 %v730
    %808 = vmatpush2.bf16.msra.mxu0 %v729
    %809 = vmatprep.mubr.bf16.mxu0 %v572
    %810 = vmatmul.mubr.bf16.gmra.mxu0 %v571
    %v811 = vpop.f32.mrf.mxu0
    %v812 = vadd.f32 %v610, %v811
    %v813 = vpop.f32.mrf.mxu0
    %v814 = vadd.f32 %v614, %v813
    %v815 = vpop.f32.mrf.mxu0
    %v816 = vpop.f32.mrf.mxu0
    %817 = vdwg.mxu0
    %v818 = vmax.f32 %v812, 0.0
    %v819 = vmax.f32 %v814, 0.0
    %v820 = vpack.c.bf16 %v818, %v818
    %v821 = vpack.c.bf16 %v819, %v819
    %v822 = vld [vmem:[#allocation6] sm:$0xff]
    %v823 = vld [vmem:[#allocation6 + $0x8] sm:$0xff]
    %v824 = vld [vmem:[#allocation6 + $0x10] sm:$0xff]
    %v825 = vld [vmem:[#allocation6 + $0x18] sm:$0xff]
    %v826 = vld [vmem:[#allocation6 + $0x20] sm:$0xff]
    %v827 = vld [vmem:[#allocation6 + $0x28] sm:$0xff]
    %v828 = vld [vmem:[#allocation6 + $0x30] sm:$0xff]
    %v829 = vld [vmem:[#allocation6 + $0x38] sm:$0xff]
    %v830 = vld [vmem:[#allocation6 + $0x40] sm:$0xff]
    %v831 = vld [vmem:[#allocation6 + $0x48] sm:$0xff]
    %v832 = vld [vmem:[#allocation6 + $0x50] sm:$0xff]
    %v833 = vld [vmem:[#allocation6 + $0x58] sm:$0xff]
    %v834 = vld [vmem:[#allocation6 + $0x60] sm:$0xff]
    %v835 = vld [vmem:[#allocation6 + $0x68] sm:$0xff]
    %v836 = vld [vmem:[#allocation6 + $0x70] sm:$0xff]
    %v837 = vld [vmem:[#allocation6 + $0x78] sm:$0xff]
    %v838 = vld [vmem:[#allocation6 + $0x80] sm:$0xff]
    %v839 = vld [vmem:[#allocation6 + $0x88] sm:$0xff]
    %v840 = vld [vmem:[#allocation6 + $0x90] sm:$0xff]
    %v841 = vld [vmem:[#allocation6 + $0x98] sm:$0xff]
    %v842 = vld [vmem:[#allocation6 + $0xa0] sm:$0xff]
    %v843 = vld [vmem:[#allocation6 + $0xa8] sm:$0xff]
    %v844 = vld [vmem:[#allocation6 + $0xb0] sm:$0xff]
    %v845 = vld [vmem:[#allocation6 + $0xb8] sm:$0xff]
    %v846 = vld [vmem:[#allocation6 + $0xc0] sm:$0xff]
    %v847 = vld [vmem:[#allocation6 + $0xc8] sm:$0xff]
    %v848 = vld [vmem:[#allocation6 + $0xd0] sm:$0xff]
    %v849 = vld [vmem:[#allocation6 + $0xd8] sm:$0xff]
    %v850 = vld [vmem:[#allocation6 + $0xe0] sm:$0xff]
    %v851 = vld [vmem:[#allocation6 + $0xe8] sm:$0xff]
    %v852 = vld [vmem:[#allocation6 + $0xf0] sm:$0xff]
    %v853 = vld [vmem:[#allocation6 + $0xf8] sm:$0xff]
    %v854 = vld [vmem:[%s11] sm:$0x3]
    %v856 = vlaneseq
    %v857 = vshrl.u32 %v856, 7
    %v858 = vsub.s32 0, %v857
    %v859 = vrot.slane %v854, %v858
    %v860 = vlaneseq
    %v861 = vshrl.u32 %v860, 7
    %v862 = vsub.s32 1, %v861
    %v863 = vrot.slane %v854, %v862
    %v898 = vunpack.c.l.b16 %v822
    %v899 = vunpack.c.h.b16 %v822
    %v900 = vunpack.c.l.b16 %v823
    %v901 = vunpack.c.h.b16 %v823
    %v902 = vunpack.c.l.b16 %v824
    %v903 = vunpack.c.h.b16 %v824
    %v904 = vunpack.c.l.b16 %v825
    %v905 = vunpack.c.h.b16 %v825
    %v906 = vunpack.c.l.b16 %v826
    %v907 = vunpack.c.h.b16 %v826
    %v908 = vunpack.c.l.b16 %v827
    %v909 = vunpack.c.h.b16 %v827
    %v910 = vunpack.c.l.b16 %v828
    %v911 = vunpack.c.h.b16 %v828
    %v912 = vunpack.c.l.b16 %v829
    %v913 = vunpack.c.h.b16 %v829
    %v914 = vunpack.c.l.b16 %v830
    %v915 = vunpack.c.h.b16 %v830
    %v916 = vunpack.c.l.b16 %v831
    %v917 = vunpack.c.h.b16 %v831
    %v918 = vunpack.c.l.b16 %v832
    %v919 = vunpack.c.h.b16 %v832
    %v920 = vunpack.c.l.b16 %v833
    %v921 = vunpack.c.h.b16 %v833
    %v922 = vunpack.c.l.b16 %v834
    %v923 = vunpack.c.h.b16 %v834
    %v924 = vunpack.c.l.b16 %v835
    %v925 = vunpack.c.h.b16 %v835
    %v926 = vunpack.c.l.b16 %v836
    %v927 = vunpack.c.h.b16 %v836
    %v928 = vunpack.c.l.b16 %v837
    %v929 = vunpack.c.h.b16 %v837
    %v930 = vunpack.c.l.b16 %v838
    %v931 = vunpack.c.h.b16 %v838
    %v932 = vunpack.c.l.b16 %v839
    %v933 = vunpack.c.h.b16 %v839
    %v934 = vunpack.c.l.b16 %v840
    %v935 = vunpack.c.h.b16 %v840
    %v936 = vunpack.c.l.b16 %v841
    %v937 = vunpack.c.h.b16 %v841
    %v938 = vunpack.c.l.b16 %v842
    %v939 = vunpack.c.h.b16 %v842
    %v940 = vunpack.c.l.b16 %v843
    %v941 = vunpack.c.h.b16 %v843
    %v942 = vunpack.c.l.b16 %v844
    %v943 = vunpack.c.h.b16 %v844
    %v944 = vunpack.c.l.b16 %v845
    %v945 = vunpack.c.h.b16 %v845
    %v946 = vunpack.c.l.b16 %v846
    %v947 = vunpack.c.h.b16 %v846
    %v948 = vunpack.c.l.b16 %v847
    %v949 = vunpack.c.h.b16 %v847
    %v950 = vunpack.c.l.b16 %v848
    %v951 = vunpack.c.h.b16 %v848
    %v952 = vunpack.c.l.b16 %v849
    %v953 = vunpack.c.h.b16 %v849
    %v954 = vunpack.c.l.b16 %v850
    %v955 = vunpack.c.h.b16 %v850
    %v956 = vunpack.c.l.b16 %v851
    %v957 = vunpack.c.h.b16 %v851
    %v958 = vunpack.c.l.b16 %v852
    %v959 = vunpack.c.h.b16 %v852
    %v960 = vunpack.c.l.b16 %v853
    %v961 = vunpack.c.h.b16 %v853
    %v962 = vpack.c.b16 %v900, %v898
    %v963 = vpack.c.b16 %v901, %v899
    %v964 = vpack.c.b16 %v904, %v902
    %v965 = vpack.c.b16 %v905, %v903
    %v966 = vpack.c.b16 %v908, %v906
    %v967 = vpack.c.b16 %v909, %v907
    %v968 = vpack.c.b16 %v912, %v910
    %v969 = vpack.c.b16 %v913, %v911
    %v970 = vpack.c.b16 %v916, %v914
    %v971 = vpack.c.b16 %v917, %v915
    %v972 = vpack.c.b16 %v920, %v918
    %v973 = vpack.c.b16 %v921, %v919
    %v974 = vpack.c.b16 %v924, %v922
    %v975 = vpack.c.b16 %v925, %v923
    %v976 = vpack.c.b16 %v928, %v926
    %v977 = vpack.c.b16 %v929, %v927
    %v978 = vpack.c.b16 %v932, %v930
    %v979 = vpack.c.b16 %v933, %v931
    %v980 = vpack.c.b16 %v936, %v934
    %v981 = vpack.c.b16 %v937, %v935
    %v982 = vpack.c.b16 %v940, %v938
    %v983 = vpack.c.b16 %v941, %v939
    %v984 = vpack.c.b16 %v944, %v942
    %v985 = vpack.c.b16 %v945, %v943
    %v986 = vpack.c.b16 %v948, %v946
    %v987 = vpack.c.b16 %v949, %v947
    %v988 = vpack.c.b16 %v952, %v950
    %v989 = vpack.c.b16 %v953, %v951
    %v990 = vpack.c.b16 %v956, %v954
    %v991 = vpack.c.b16 %v957, %v955
    %v992 = vpack.c.b16 %v960, %v958
    %v993 = vpack.c.b16 %v961, %v959
    %1026 = vmatprep.subr.bf16.mxu0 %v977
    %1027 = vmatpush1.bf16.msra.mxu0 %v976
    %1028 = vmatprep.subr.bf16.mxu0 %v975
    %1029 = vmatpush1.bf16.msra.mxu0 %v974
    %1030 = vmatprep.subr.bf16.mxu0 %v973
    %1031 = vmatpush1.bf16.msra.mxu0 %v972
    %1032 = vmatprep.subr.bf16.mxu0 %v971
    %1033 = vmatpush1.bf16.msra.mxu0 %v970
    %1034 = vmatprep.subr.bf16.mxu0 %v969
    %1035 = vmatpush1.bf16.msra.mxu0 %v968
    %1036 = vmatprep.subr.bf16.mxu0 %v967
    %1037 = vmatpush1.bf16.msra.mxu0 %v966
    %1038 = vmatprep.subr.bf16.mxu0 %v965
    %1039 = vmatpush1.bf16.msra.mxu0 %v964
    %1040 = vmatprep.subr.bf16.mxu0 %v963
    %1041 = vmatpush1.bf16.msra.mxu0 %v962
    %1042 = vmatprep.subr.bf16.mxu0 %v993
    %1043 = vmatpush2.bf16.msra.mxu0 %v992
    %1044 = vmatprep.subr.bf16.mxu0 %v991
    %1045 = vmatpush2.bf16.msra.mxu0 %v990
    %1046 = vmatprep.subr.bf16.mxu0 %v989
    %1047 = vmatpush2.bf16.msra.mxu0 %v988
    %1048 = vmatprep.subr.bf16.mxu0 %v987
    %1049 = vmatpush2.bf16.msra.mxu0 %v986
    %1050 = vmatprep.subr.bf16.mxu0 %v985
    %1051 = vmatpush2.bf16.msra.mxu0 %v984
    %1052 = vmatprep.subr.bf16.mxu0 %v983
    %1053 = vmatpush2.bf16.msra.mxu0 %v982
    %1054 = vmatprep.subr.bf16.mxu0 %v981
    %1055 = vmatpush2.bf16.msra.mxu0 %v980
    %1056 = vmatprep.subr.bf16.mxu0 %v979
    %1057 = vmatpush2.bf16.msra.mxu0 %v978
    %1058 = vmatprep.mubr.bf16.mxu0 %v821
    %1059 = vmatmul.mubr.bf16.gmra.mxu0 %v820
    %v1060 = vpop.f32.mrf.mxu0
    %v1061 = vadd.f32 %v859, %v1060
    %v1062 = vpop.f32.mrf.mxu0
    %v1063 = vadd.f32 %v863, %v1062
    %v1064 = vpop.f32.mrf.mxu0
    %v1065 = vpop.f32.mrf.mxu0
    %1066 = vdwg.mxu0
    %v1067 = vmax.f32 %v1061, 0.0
    %v1068 = vmax.f32 %v1063, 0.0
    %v1069 = vpack.c.bf16 %v1067, %v1067
    %v1070 = vpack.c.bf16 %v1068, %v1068
    %v1071 = vld [vmem:[%s12] sm:$0xf]
    %v1072 = vld [vmem:[%s12 + $0x4] sm:$0xf]
    %v1073 = vld [vmem:[%s12 + $0x8] sm:$0xf]
    %v1074 = vld [vmem:[%s12 + $0xc] sm:$0xf]
    %v1075 = vld [vmem:[%s12 + $0x10] sm:$0xf]
    %v1076 = vld [vmem:[%s12 + $0x14] sm:$0xf]
    %v1077 = vld [vmem:[%s12 + $0x18] sm:$0xf]
    %v1078 = vld [vmem:[%s12 + $0x1c] sm:$0xf]
    %v1079 = vld [vmem:[%s12 + $0x20] sm:$0xf]
    %v1080 = vld [vmem:[%s12 + $0x24] sm:$0xf]
    %v1081 = vld [vmem:[%s12 + $0x28] sm:$0xf]
    %v1082 = vld [vmem:[%s12 + $0x2c] sm:$0xf]
    %v1083 = vld [vmem:[%s12 + $0x30] sm:$0xf]
    %v1084 = vld [vmem:[%s12 + $0x34] sm:$0xf]
    %v1085 = vld [vmem:[%s12 + $0x38] sm:$0xf]
    %v1086 = vld [vmem:[%s12 + $0x3c] sm:$0xf]
    %v1087 = vld [vmem:[%s12 + $0x40] sm:$0xf]
    %v1088 = vld [vmem:[%s12 + $0x44] sm:$0xf]
    %v1089 = vld [vmem:[%s12 + $0x48] sm:$0xf]
    %v1090 = vld [vmem:[%s12 + $0x4c] sm:$0xf]
    %v1091 = vld [vmem:[%s12 + $0x50] sm:$0xf]
    %v1092 = vld [vmem:[%s12 + $0x54] sm:$0xf]
    %v1093 = vld [vmem:[%s12 + $0x58] sm:$0xf]
    %v1094 = vld [vmem:[%s12 + $0x5c] sm:$0xf]
    %v1095 = vld [vmem:[%s12 + $0x60] sm:$0xf]
    %v1096 = vld [vmem:[%s12 + $0x64] sm:$0xf]
    %v1097 = vld [vmem:[%s12 + $0x68] sm:$0xf]
    %v1098 = vld [vmem:[%s12 + $0x6c] sm:$0xf]
    %v1099 = vld [vmem:[%s12 + $0x70] sm:$0xf]
    %v1100 = vld [vmem:[%s12 + $0x74] sm:$0xf]
    %v1101 = vld [vmem:[%s12 + $0x78] sm:$0xf]
    %v1102 = vld [vmem:[%s12 + $0x7c] sm:$0xf]
    %v1103 = vld [vmem:[%s13] sm:$0x1]
    %v1105 = vlaneseq
    %v1106 = vshrl.u32 %v1105, 7
    %v1107 = vsub.s32 0, %v1106
    %v1108 = vrot.slane %v1103, %v1107
    %v1142 = vunpack.c.l.b16 %v1071
    %v1143 = vunpack.c.l.b16 %v1072
    %v1144 = vunpack.c.l.b16 %v1073
    %v1145 = vunpack.c.l.b16 %v1074
    %v1146 = vunpack.c.l.b16 %v1075
    %v1147 = vunpack.c.l.b16 %v1076
    %v1148 = vunpack.c.l.b16 %v1077
    %v1149 = vunpack.c.l.b16 %v1078
    %v1150 = vunpack.c.l.b16 %v1079
    %v1151 = vunpack.c.l.b16 %v1080
    %v1152 = vunpack.c.l.b16 %v1081
    %v1153 = vunpack.c.l.b16 %v1082
    %v1154 = vunpack.c.l.b16 %v1083
    %v1155 = vunpack.c.l.b16 %v1084
    %v1156 = vunpack.c.l.b16 %v1085
    %v1157 = vunpack.c.l.b16 %v1086
    %v1158 = vunpack.c.l.b16 %v1087
    %v1159 = vunpack.c.l.b16 %v1088
    %v1160 = vunpack.c.l.b16 %v1089
    %v1161 = vunpack.c.l.b16 %v1090
    %v1162 = vunpack.c.l.b16 %v1091
    %v1163 = vunpack.c.l.b16 %v1092
    %v1164 = vunpack.c.l.b16 %v1093
    %v1165 = vunpack.c.l.b16 %v1094
    %v1166 = vunpack.c.l.b16 %v1095
    %v1167 = vunpack.c.l.b16 %v1096
    %v1168 = vunpack.c.l.b16 %v1097
    %v1169 = vunpack.c.l.b16 %v1098
    %v1170 = vunpack.c.l.b16 %v1099
    %v1171 = vunpack.c.l.b16 %v1100
    %v1172 = vunpack.c.l.b16 %v1101
    %v1173 = vunpack.c.l.b16 %v1102
    %v1174 = vpack.c.b16 %v1143, %v1142
    %v1175 = vpack.c.b16 %v1145, %v1144
    %v1176 = vpack.c.b16 %v1147, %v1146
    %v1177 = vpack.c.b16 %v1149, %v1148
    %v1178 = vpack.c.b16 %v1151, %v1150
    %v1179 = vpack.c.b16 %v1153, %v1152
    %v1180 = vpack.c.b16 %v1155, %v1154
    %v1181 = vpack.c.b16 %v1157, %v1156
    %v1182 = vpack.c.b16 %v1159, %v1158
    %v1183 = vpack.c.b16 %v1161, %v1160
    %v1184 = vpack.c.b16 %v1163, %v1162
    %v1185 = vpack.c.b16 %v1165, %v1164
    %v1186 = vpack.c.b16 %v1167, %v1166
    %v1187 = vpack.c.b16 %v1169, %v1168
    %v1188 = vpack.c.b16 %v1171, %v1170
    %v1189 = vpack.c.b16 %v1173, %v1172
    %1206 = vmatprep.subr.bf16.mxu0 0
    %1207 = vmatpush1.bf16.msra.mxu0 %v1181
    %1208 = vmatprep.subr.bf16.mxu0 0
    %1209 = vmatpush1.bf16.msra.mxu0 %v1180
    %1210 = vmatprep.subr.bf16.mxu0 0
    %1211 = vmatpush1.bf16.msra.mxu0 %v1179
    %1212 = vmatprep.subr.bf16.mxu0 0
    %1213 = vmatpush1.bf16.msra.mxu0 %v1178
    %1214 = vmatprep.subr.bf16.mxu0 0
    %1215 = vmatpush1.bf16.msra.mxu0 %v1177
    %1216 = vmatprep.subr.bf16.mxu0 0
    %1217 = vmatpush1.bf16.msra.mxu0 %v1176
    %1218 = vmatprep.subr.bf16.mxu0 0
    %1219 = vmatpush1.bf16.msra.mxu0 %v1175
    %1220 = vmatprep.subr.bf16.mxu0 0
    %1221 = vmatpush1.bf16.msra.mxu0 %v1174
    %1222 = vmatprep.subr.bf16.mxu0 0
    %1223 = vmatpush2.bf16.msra.mxu0 %v1189
    %1224 = vmatprep.subr.bf16.mxu0 0
    %1225 = vmatpush2.bf16.msra.mxu0 %v1188
    %1226 = vmatprep.subr.bf16.mxu0 0
    %1227 = vmatpush2.bf16.msra.mxu0 %v1187
    %1228 = vmatprep.subr.bf16.mxu0 0
    %1229 = vmatpush2.bf16.msra.mxu0 %v1186
    %1230 = vmatprep.subr.bf16.mxu0 0
    %1231 = vmatpush2.bf16.msra.mxu0 %v1185
    %1232 = vmatprep.subr.bf16.mxu0 0
    %1233 = vmatpush2.bf16.msra.mxu0 %v1184
    %1234 = vmatprep.subr.bf16.mxu0 0
    %1235 = vmatpush2.bf16.msra.mxu0 %v1183
    %1236 = vmatprep.subr.bf16.mxu0 0
    %1237 = vmatpush2.bf16.msra.mxu0 %v1182
    %1238 = vmatprep.mubr.bf16.mxu0 %v1070
    %1239 = vmatmul.mubr.bf16.gmra.mxu0 %v1069
    %v1240 = vpop.f32.mrf.mxu0
    %v1241 = vadd.f32 %v1108, %v1240
    %v1242 = vpop.f32.mrf.mxu0
    %v1243 = vpop.f32.mrf.mxu0
    %v1244 = vpop.f32.mrf.mxu0
    %1245 = vdwg.mxu0
    %v1246 = vtanh.pop %v1241
    %1247 = vst [vmem:[%s14] sm:$0x3] %v1246
    // Predicated region
    $region70: #{_lambda_.1} parent=1 // pred_check
      _
    $region71: #{_lambda_.1} parent=1 // pred_check_branch
      %1249 = sbr.rel (0) target = $region73
    $region72: #{_lambda_.1} parent=1 // pred_region
      _
    $region73: #{_lambda_.1} parent=1 // pred_fallthru
      _
    // Predicated region
    $region74: #{_lambda_.1} parent=1 // pred_check
      _
    $region75: #{_lambda_.1} parent=1 // pred_check_branch
      %1251 = sbr.rel (0) target = $region77
    $region76: #{_lambda_.1} parent=1 // pred_region
      _
    $region77: #{_lambda_.1} parent=1 // pred_fallthru
      _
    %1252 = vsyncpa [#allocation3], 1
    %1253 = vsyncpa [#allocation5], 1

</llo_original>
